<compile_context>
chip_gen: v5e
topology: v5e:2x2
jax: 0.10.0
libtpu: 0.0.40
codegen_flags: <defaults>
</compile_context>

<pallas_src>
import jax
import jax.numpy as jnp
from jax.experimental import pallas as pl
from jax.experimental.pallas import tpu as pltpu


def _sin_kernel(x_ref, o_ref):
    # Elementwise VPU/EUP path: whole VMEM tile in, sin, whole tile out.
    o_ref[...] = jnp.sin(x_ref[...])


# Lane widths to try (widest first); all multiples of 128.
_LANE_CANDIDATES = (2048, 1024, 512, 256, 128)
# Target bytes per block (per buffer). With double-buffered input + output this
# is ~4x -> 8 MiB of VMEM: safe on v5e (16 MiB default scoped), v6e, v7x.
_TARGET_BLOCK_BYTES = 2 * 1024 * 1024
# Row (sublane) quantum: 32 covers f32 (needs 8), bf16 (16), int8/fp8 (32).
_ROW_QUANTUM = 32


def sin_layer(x: jax.Array) -> jax.Array:
    """Pallas implementation of Sin_Layer.forward: elementwise sin."""
    orig_shape = x.shape
    n = x.size
    if n == 0:
        return x

    flat = x.reshape(-1)

    # Pick the widest lane width that divides N exactly (avoids any padding /
    # post-slice HBM round trip in the common case).
    lane = 128
    for cand in _LANE_CANDIDATES:
        if n % cand == 0:
            lane = cand
            break

    pad = (-n) % lane
    if pad:
        # Tiny tail pad only; sin(0) = 0, and the tail is dropped afterwards.
        flat = jnp.pad(flat, (0, pad))

    rows = flat.size // lane
    x2 = flat.reshape(rows, lane)

    itemsize = jnp.dtype(x.dtype).itemsize
    # Rows per block: ~_TARGET_BLOCK_BYTES, rounded down to a multiple of 32.
    max_rows = (_TARGET_BLOCK_BYTES // (lane * itemsize))
    max_rows = max(_ROW_QUANTUM, (max_rows // _ROW_QUANTUM) * _ROW_QUANTUM)

    if rows <= max_rows:
        # Single block covering the full row extent (always a legal block
        # shape because it equals the full array dim).
        row_tile = rows
        grid = (1,)
    else:
        row_tile = max_rows
        grid = (pl.cdiv(rows, row_tile),)  # ragged last block handled by Pallas

    n_padded = rows * lane
    cost = pl.CostEstimate(
        flops=15 * n_padded,          # rough poly cost of sin per element
        transcendentals=n_padded,
        bytes_accessed=2 * n_padded * itemsize,
    )

    out = pl.pallas_call(
        _sin_kernel,
        out_shape=jax.ShapeDtypeStruct((rows, lane), x.dtype),
        grid_spec=pltpu.PrefetchScalarGridSpec(
            num_scalar_prefetch=0,
            grid=grid,
            in_specs=[pl.BlockSpec((row_tile, lane), lambda i: (i, 0))],
            out_specs=pl.BlockSpec((row_tile, lane), lambda i: (i, 0)),
        ),
        compiler_params=pltpu.CompilerParams(
            dimension_semantics=("parallel",),
            vmem_limit_bytes=32 * 1024 * 1024,
        ),
        cost_estimate=cost,
    )(x2)

    out_flat = out.reshape(-1)
    if pad:
        out_flat = out_flat[:n]
    return out_flat.reshape(orig_shape)


if __name__ == "__main__":
    key = jax.random.PRNGKey(0)

    # nnodely layers operate on (batch, window, features) tensors.
    x = jax.random.normal(key, (2, 8, 32), dtype=jnp.float32)
    y = jax.block_until_ready(sin_layer(x))
    ref = jnp.sin(x)
    assert y.shape == x.shape and y.dtype == x.dtype
    assert jnp.allclose(y, ref, atol=1e-6, rtol=1e-6)

    # Also exercise the padded-tail path (element count not divisible by 128).
    k2 = jax.random.PRNGKey(1)
    x2 = jax.random.normal(k2, (3, 5, 7), dtype=jnp.float32)
    y2 = jax.block_until_ready(sin_layer(x2))
    assert y2.shape == x2.shape and y2.dtype == x2.dtype
    assert jnp.allclose(y2, jnp.sin(x2), atol=1e-6, rtol=1e-6)

    print("KERNEL_OK")
</pallas_src>

<mosaic_0001>
module attributes {stable_mosaic.version = 11 : i64} {
  func.func @_sin_kernel(%arg0: i32, %arg1: memref<1x512xf32, #tpu.memory_space<vmem>>, %arg2: memref<1x512xf32, #tpu.memory_space<vmem>>) attributes {dimension_semantics = [#tpu.dimension_semantics<parallel>], iteration_bounds = array<i64: 1>, scalar_prefetch = 0 : i64, scratch_operands = 0 : i64, tpu.core_type = #tpu.core_type<tc>, window_params = [{transform_indices = @transform_0, window_bounds = array<i64: 1, 512>}, {transform_indices = @transform_1, window_bounds = array<i64: 1, 512>}]} {
    %c0 = arith.constant 0 : index
    %c0_0 = arith.constant 0 : index
    %0 = vector.load %arg1[%c0, %c0_0] : memref<1x512xf32, #tpu.memory_space<vmem>>, vector<1x512xf32>
    %1 = math.sin %0 : vector<1x512xf32>
    %c0_1 = arith.constant 0 : index
    %c0_2 = arith.constant 0 : index
    %2 = vector.load %arg2[%c0_1, %c0_2] : memref<1x512xf32, #tpu.memory_space<vmem>>, vector<1x512xf32>
    tpu.vector_store %arg2[%c0_1, %c0_2], %1 {strides = array<i32>} : memref<1x512xf32, #tpu.memory_space<vmem>>, vector<1x512xf32>,
    return
  }
  func.func @transform_0(%arg0: i32) -> (i32, i32) {
    %c0_i32 = arith.constant 0 : i32
    %c0_i32_0 = arith.constant 0 : i32
    return %arg0, %c0_i32 : i32, i32
  }
  func.func @transform_1(%arg0: i32) -> (i32, i32) {
    %c0_i32 = arith.constant 0 : i32
    %c0_i32_0 = arith.constant 0 : i32
    return %arg0, %c0_i32 : i32, i32
  }
}

</mosaic_0001>

<llo_original>
// kernel: tpu_custom_call.1
$region0: #{tpu_custom_call.1}
  #allocation0 [shape = 'u32[]', space=smem, size = 0x4, offset = 0x4, fixed_abs, tag = 'smem constant byte address 0x4 - core index']
  #allocation1 [shape = 'u32[72,128]{1,0:T(1,128)}', space=vmem, size = 0x9000, scoped, tag = 'internal scratch']
  %s0 = inlined_call_operand.hbm [shape: f32[1,512], index: 0, kind: input, shape index: {}]
  %s1 = inlined_call_operand.hbm [shape: f32[1,512], index: 1, kind: output, shape index: {}]
  %s2 = sld [smem:[#allocation0]]
  $region18: #{tpu_custom_call.1} parent=0
    _
  %s4 = ssub.s32 1, %s2
  %s5 = scalar_select 0, %s4, %s2
  $region1: #{tpu_custom_call.1} parent=0
    #allocation2 [shape = 'u8[2048]{0}', space=vmem, size = 0x800, scoped, tag = 'input window, operand 0, single buffered']
    #allocation3 [shape = 's32[1]{0}', space=sflag, size = 0x4, scoped, tag = 'scoped memory for tpu_custom_call.1']
    #allocation4 [shape = 's32[1]{0}', space=sflag, size = 0x4, scoped, tag = 'scoped memory for tpu_custom_call.1']
    #allocation5 [shape = 'u8[2048]{0}', space=vmem, size = 0x800, scoped, tag = 'output window, operand 0, single buffered']
    %6 = vsyncpa [#allocation3], 0
    %7 = vsyncpa [#allocation4], 0
    // Predicated region
    $region2: #{tpu_custom_call.1} parent=1 // pred_check
      _
    $region3: #{tpu_custom_call.1} parent=1 // pred_check_branch
      %9 = sbr.rel (0) target = $region5
    $region4: #{tpu_custom_call.1} parent=1 // pred_region
      %11 = vsyncadd [#allocation3], 0
      %s13 = sshll.u32 %s0, 4
      %s14 = int_to_ptr.hbm [resolvable:$true] %s13
      %s15 = sshll.u32 [#allocation2], 4
      %s16 = int_to_ptr.vmem [resolvable:$true] %s15
      %18 = dma.hbm_to_vmem [thread:$0]  %s14, 64, %s16, [#allocation3]
    $region5: #{tpu_custom_call.1} parent=1 // pred_fallthru
      _
    // Predicated region
    $region6: #{tpu_custom_call.1} parent=1 // pred_check
      _
    $region7: #{tpu_custom_call.1} parent=1 // pred_check_branch
      %20 = sbr.rel (0) target = $region9
    $region8: #{tpu_custom_call.1} parent=1 // pred_region
      %22 = dma.done [#allocation3], 64
    $region9: #{tpu_custom_call.1} parent=1 // pred_fallthru
      _
    %v23 = vld [vmem:[#allocation2] sm:$0xf]
    %v24 = vand.u32 2147483647, %v23
    %vm25 = vcmp.le.f32.partialorder %v24, 0.7853982
    %vm26 = vcmp.lt.s32.totalorder %v23, 0
    %v27 = vand.u32 %v23, 2139095040
    %v28 = vshrl.u32 %v27, 23
    %v29 = vsub.s32 %v28, 127
    %v30 = vand.u32 2147483647, %v23
    %v31 = vand.u32 %v30, 8388607
    %v32 = vor.u32 %v31, 8388608
    %v33 = vsub.s32 0, %v32
    %v34 = vadd.s32 %v29, 1
    %vm35 = vcmp.gt.s32.totalorder %v34, 0
    %v36 = vsel %vm35, %v34, 0
    %v37 = vshrl.u32 %v36, 5
    %v38 = vand.u32 %v36, 31
    %v39 = vsub.s32 32, %v38
    %v40 = vshrl.u32 683565275, %v39
    %v41 = vshll.u32 683565275, %v38
    %v42 = vshrl.u32 2475754826, %v39
    %v43 = vor.u32 %v41, %v42
    %v44 = vshll.u32 2475754826, %v38
    %v45 = vshrl.u32 2131351028, %v39
    %v46 = vor.u32 %v44, %v45
    %v47 = vshll.u32 2131351028, %v38
    %v48 = vshrl.u32 2102212464, %v39
    %v49 = vor.u32 %v47, %v48
    %v50 = vshll.u32 2102212464, %v38
    %v51 = vshrl.u32 920167782, %v39
    %v52 = vor.u32 %v50, %v51
    %v53 = vshll.u32 920167782, %v38
    %v54 = vshrl.u32 1326507024, %v39
    %v55 = vor.u32 %v53, %v54
    %vm56 = vcmp.lt.s32.totalorder %v37, 1
    %vm57 = vcmp.lt.s32.totalorder %v37, 2
    %vm58 = vcmp.lt.s32.totalorder %v37, 3
    %vm59 = vcmp.lt.s32.totalorder %v37, 4
    %v60 = vsel %vm56, %v40, %v43
    %v61 = vsel %vm59, %v49, 2102212464
    %v62 = vsel %vm58, %v46, %v61
    %v63 = vsel %vm57, %v60, %v62
    %v64 = vsel %vm56, %v43, %v46
    %v65 = vsel %vm59, %v52, 920167782
    %v66 = vsel %vm58, %v49, %v65
    %v67 = vsel %vm57, %v64, %v66
    %v68 = vsel %vm56, %v46, %v49
    %v69 = vsel %vm59, %v55, 1326507024
    %v70 = vsel %vm58, %v52, %v69
    %v71 = vsel %vm57, %v68, %v70
    %v72 = vshll.u32 %v32, 8
    %v73 = vand.u32 %v72, 65535
    %v74 = vshrl.u32 %v72, 16
    %v75 = vand.u32 %v71, 65535
    %v76 = vshrl.u32 %v71, 16
    %v77 = vmul.u32 %v73, %v75
    %v78 = vmul.u32 %v73, %v76
    %v79 = vmul.u32 %v74, %v75
    %v80 = vmul.u32 %v74, %v76
    %v81 = vshll.u32 %v78, 16
    %v82 = vshrl.u32 %v78, 16
    %v83 = vshll.u32 %v79, 16
    %v84 = vshrl.u32 %v79, 16
    %vm85 = vc.u32 %v77, %v81
    %v86 = vsel %vm85, 1, 0
    %v87 = vadd.s32 %v77, %v81
    %v88 = vadd.s32 %v80, %v86
    %vm89 = vc.u32 %v87, %v83
    %v90 = vsel %vm89, 1, 0
    %v91 = vadd.s32 %v87, %v83
    %v92 = vadd.s32 %v88, %v90
    %v93 = vadd.s32 %v92, %v82
    %v94 = vadd.s32 %v93, %v84
    %v95 = vand.u32 %v72, 65535
    %v96 = vshrl.u32 %v72, 16
    %v97 = vand.u32 %v67, 65535
    %v98 = vshrl.u32 %v67, 16
    %v99 = vmul.u32 %v95, %v97
    %v100 = vmul.u32 %v95, %v98
    %v101 = vmul.u32 %v96, %v97
    %v102 = vmul.u32 %v96, %v98
    %v103 = vshll.u32 %v100, 16
    %v104 = vshrl.u32 %v100, 16
    %v105 = vshll.u32 %v101, 16
    %v106 = vshrl.u32 %v101, 16
    %vm107 = vc.u32 %v99, %v103
    %v108 = vsel %vm107, 1, 0
    %v109 = vadd.s32 %v99, %v103
    %v110 = vadd.s32 %v102, %v108
    %vm111 = vc.u32 %v109, %v105
    %v112 = vsel %vm111, 1, 0
    %v113 = vadd.s32 %v109, %v105
    %v114 = vadd.s32 %v110, %v112
    %v115 = vadd.s32 %v114, %v104
    %v116 = vadd.s32 %v115, %v106
    %v117 = vmul.u32 %v72, %v63
    %v118 = vadd.s32 %v94, %v113
    %vm119 = vc.u32 %v94, %v113
    %v120 = vadd.s32 %v116, 1
    %v121 = vsel %vm119, %v120, %v116
    %v122 = vadd.s32 %v117, %v121
    %v123 = vadd.s32 %v122, 536870912
    %v124 = vshrl.u32 %v123, 30
    %v125 = vshll.u32 %v124, 30
    %v126 = vsub.s32 %v122, %v125
    %vm127 = vcmp.lt.s32.totalorder %v126, 0
    %v128 = vsub.s32 0, %v126
    %v129 = vsel %vm127, %v128, %v126
    %v130 = vclz %v129
    %v131 = vsub.s32 %v130, 2
    %vm132 = vcmp.gt.s32.totalorder 0, %v131
    %v133 = vsel %vm132, 0, %v131
    %v134 = vsub.s32 32, %v133
    %v135 = vshll.u32 %v126, %v133
    %v136 = vshrl.u32 %v118, %v134
    %v137 = vor.u32 %v135, %v136
    %v138 = vsub.s32 4294967266, %v133
    %v139 = vadd.s32 %v138, 127
    %v140 = vshll.u32 %v139, 23
    %v141 = vor.u32 4788187, %v140
    %v142 = vand.u32 2147483647, %v141
    %v144 = vcvt.s32.f32 %v137
    %v145 = vmul.f32 %v144, %v142
    %v146 = vxor.u32 %v145, 2147483648
    %v147 = vsel %vm26, %v146, %v145
    %v148 = vsub.s32 4, %v124
    %v149 = vsel %vm26, %v148, %v124
    %v150 = vsel %vm25, %v23, %v147
    %v151 = vsel %vm25, 0, %v149
    %v152 = vmul.f32 %v150, %v150
    %v153 = vmul.f32 %v152, -0.001358992
    %v154 = vadd.f32 %v153, 0.041655596
    %v155 = vmul.f32 %v152, %v154
    %v156 = vadd.f32 %v155, -0.4999988
    %v157 = vmul.f32 %v152, %v156
    %v158 = vadd.f32 1.0, %v157
    %v159 = vmul.f32 %v150, %v150
    %v160 = vmul.f32 %v159, -0.00019511016
    %v161 = vadd.f32 %v160, 0.008332121
    %v162 = vmul.f32 %v159, %v161
    %v163 = vadd.f32 %v162, -0.16666654
    %v164 = vmul.f32 %v159, %v163
    %v165 = vadd.f32 %v164, 1.0
    %v166 = vmul.f32 %v165, %v150
    %vm167 = vweird.f32 %v23
    %v168 = vadd.s32 %v151, 3
    %v169 = vand.u32 %v168, 3
    %vm170 = vcmp.lt.s32.totalorder %v169, 2
    %vm171 = vcmp.eq.s32.totalorder %v169, 0
    %v172 = vxor.u32 %v166, 2147483648
    %v173 = vsel %vm171, %v158, %v172
    %vm174 = vcmp.eq.s32.totalorder %v169, 2
    %v175 = vxor.u32 %v158, 2147483648
    %v176 = vsel %vm174, %v175, %v166
    %v177 = vsel %vm170, %v173, %v176
    %v178 = vsel %vm167, nan, %v177
    %v179 = vlaneseq
    %vm180 = vcmp.ge.s32.totalorder %v179, 0
    %vm181 = vcmp.lt.s32.totalorder %v179, 512
    %vm182 = vmand %vm180, %vm181
    %183 = vst.msk [vmem:[#allocation5] sm:$0xf] %vm182, %v178
    // Predicated region
    $region10: #{tpu_custom_call.1} parent=1 // pred_check
      _
    $region11: #{tpu_custom_call.1} parent=1 // pred_check_branch
      %185 = sbr.rel (0) target = $region13
    $region12: #{tpu_custom_call.1} parent=1 // pred_region
      %187 = vsyncadd [#allocation4], 0
      %s189 = sshll.u32 [#allocation5], 4
      %s190 = int_to_ptr.vmem [resolvable:$true] %s189
      %s191 = sshll.u32 %s1, 4
      %s192 = int_to_ptr.hbm [resolvable:$true] %s191
      %194 = dma.vmem_to_hbm [thread:$0]  %s190, 64, %s192, [#allocation4]
    $region13: #{tpu_custom_call.1} parent=1 // pred_fallthru
      _
    // Predicated region
    $region14: #{tpu_custom_call.1} parent=1 // pred_check
      _
    $region15: #{tpu_custom_call.1} parent=1 // pred_check_branch
      %196 = sbr.rel (0) target = $region17
    $region16: #{tpu_custom_call.1} parent=1 // pred_region
      %198 = dma.done [#allocation4], 64
    $region17: #{tpu_custom_call.1} parent=1 // pred_fallthru
      _
    %199 = vsyncpa [#allocation3], 1
    %200 = vsyncpa [#allocation4], 1

</llo_original>
